<compile_context>
chip_gen: v5e
topology: v5e:2x2
jax: 0.10.0
libtpu: 0.0.40
codegen_flags: <defaults>
</compile_context>

<pallas_src>
import functools

import jax
import jax.numpy as jnp
from jax.experimental import pallas as pl
from jax.experimental.pallas import tpu as pltpu


def _round_up(x, m):
    return (x + m - 1) // m * m


# ------------------------------ fused kernel ------------------------------- #

def _fused_gcn_kernel(feat_ref, a_ref, w_in_ref, b_in_ref,
                      w1_ref, w2_ref, bh_ref,
                      w_out_ref, b_out_ref,
                      o_ref, x_scr, *, depth):
    # Input layer: x = relu(features @ W_in + b_in)
    x = jnp.dot(feat_ref[...], w_in_ref[...], preferred_element_type=jnp.float32)
    x_scr[...] = jnp.maximum(x + b_in_ref[...], 0.0)

    # Mean-normalized adjacency, stored bf16 (native MXU input dtype).
    a_bf = a_ref[...]

    # depth is a small static integer -> unrolled layer loop; all layer weights stay
    # VMEM-resident, x stays resident in the VMEM scratch across layers.
    for d in range(depth):
        x = x_scr[...]                                          # (N, W) f32
        # h_in = A_norm @ x  (mean neighbour aggregation), bf16 inputs, f32 accumulate.
        h_in = jnp.dot(a_bf, x.astype(jnp.bfloat16),
                       preferred_element_type=jnp.float32)
        # relu(Linear(cat([h_in, x], dim=1))) == relu(h_in @ W1 + x @ W2 + b)
        acc = jnp.dot(h_in, w1_ref[d], preferred_element_type=jnp.float32)
        acc = acc + jnp.dot(x, w2_ref[d], preferred_element_type=jnp.float32)
        acc = acc + bh_ref[d]
        x_scr[...] = jnp.maximum(acc, 0.0)

    # Output layer (lane-padded to a multiple of 128 columns; wrapper slices it back).
    out = jnp.dot(x_scr[...], w_out_ref[...], preferred_element_type=jnp.float32)
    o_ref[...] = (out + b_out_ref[...]).astype(o_ref.dtype)


# ------------------------- params & forward -------------------------------- #

def init_params(key, feature_dim, weight_dim, output_dim, depth):
    """Deterministic PyTorch-style U(-1/sqrt(fan_in), 1/sqrt(fan_in)) init."""
    def lin(k, fin, fout):
        kw, kb = jax.random.split(k)
        bound = 1.0 / jnp.sqrt(jnp.float32(fin))
        w = jax.random.uniform(kw, (fin, fout), jnp.float32, -bound, bound)
        b = jax.random.uniform(kb, (1, fout), jnp.float32, -bound, bound)
        return w, b

    keys = jax.random.split(key, depth + 2)
    w_in, b_in = lin(keys[0], feature_dim, weight_dim)
    w1s, w2s, bs = [], [], []
    for d in range(depth):
        w, b = lin(keys[1 + d], 2 * weight_dim, weight_dim)
        # cat order is (h_in, x): first weight_dim input rows act on h_in, rest on x
        w1s.append(w[:weight_dim, :])
        w2s.append(w[weight_dim:, :])
        bs.append(b)
    w_out, b_out = lin(keys[-1], weight_dim, output_dim)
    return {
        "input": (w_in, b_in),
        "hidden": (jnp.stack(w1s), jnp.stack(w2s), jnp.stack(bs)),
        "output": (w_out, b_out),
    }


def vanilla_gcn_forward(params, a_norm, features):
    w_in, b_in = params["input"]
    w1_stack, w2_stack, bh_stack = params["hidden"]
    w_out, b_out = params["output"]

    N, _ = features.shape
    _, W = w_in.shape
    depth = int(w1_stack.shape[0])
    out_dim = w_out.shape[1]

    # Pad node count to the sublane granule (8) so the whole-array blocks tile cleanly.
    n_pad = _round_up(max(N, 8), 8)
    if n_pad != N:
        features = jnp.pad(features, ((0, n_pad - N), (0, 0)))
        a_norm = jnp.pad(a_norm, ((0, n_pad - N), (0, n_pad - N)))

    # Pad the narrow output projection to a full 128-lane slab (unmasked vst, full MXU
    # lanes); sliced back below.
    out_pad = _round_up(out_dim, 128)
    w_out_p = jnp.zeros((W, out_pad), jnp.float32).at[:, :out_dim].set(w_out)
    b_out_p = jnp.zeros((1, out_pad), jnp.float32).at[:, :out_dim].set(b_out)

    # bf16 adjacency: halves the dominant O(N^2) stream, native MXU input dtype.
    a_bf16 = a_norm.astype(jnp.bfloat16)

    vmem = pl.BlockSpec(memory_space=pltpu.MemorySpace.VMEM)
    out = pl.pallas_call(
        functools.partial(_fused_gcn_kernel, depth=depth),
        out_shape=jax.ShapeDtypeStruct((n_pad, out_pad), jnp.float32),
        in_specs=[vmem] * 9,
        out_specs=vmem,
        scratch_shapes=[pltpu.VMEM((n_pad, W), jnp.float32)],
    )(features, a_bf16, w_in, b_in, w1_stack, w2_stack, bh_stack, w_out_p, b_out_p)

    return out[:N, :out_dim]


# --------------------------------- main ------------------------------------ #

if __name__ == "__main__":
    key = jax.random.PRNGKey(0)
    k_feat, k_adj, k_param = jax.random.split(key, 3)

    N = 64             # number of graph nodes
    feature_dim = 8
    weight_dim = 128
    output_dim = 1
    depth = 3          # small depth for the example (module default is 10)

    features = jax.random.normal(k_feat, (N, feature_dim), jnp.float32)

    # Deterministic random directed graph (no self-loops), mean-normalized by in-degree.
    adj = (jax.random.uniform(k_adj, (N, N)) < 0.1).astype(jnp.float32)
    adj = adj * (1.0 - jnp.eye(N, dtype=jnp.float32))
    in_deg = adj.sum(axis=1, keepdims=True)
    a_norm = jnp.where(in_deg > 0, adj / jnp.maximum(in_deg, 1.0), 0.0)

    params = init_params(k_param, feature_dim, weight_dim, output_dim, depth)

    # TODO(synk): dropout (module default None) and the rev=True/g_rev path are not
    # exercised; the reference rev-path also skips its Linear (upstream bug).
    out = vanilla_gcn_forward(params, a_norm, features)
    jax.block_until_ready(out)
    assert out.shape == (N, output_dim) and out.dtype == jnp.float32
    assert bool(jnp.all(jnp.isfinite(out)))
    print("KERNEL_OK")
</pallas_src>

<mosaic_0001>
module attributes {stable_mosaic.version = 11 : i64} {
  func.func @_fused_gcn_kernel(%arg0: memref<64x8xf32, #tpu.memory_space<vmem>>, %arg1: memref<64x64xbf16, #tpu.memory_space<vmem>>, %arg2: memref<8x128xf32, #tpu.memory_space<vmem>>, %arg3: memref<1x128xf32, #tpu.memory_space<vmem>>, %arg4: memref<3x128x128xf32, #tpu.memory_space<vmem>>, %arg5: memref<3x128x128xf32, #tpu.memory_space<vmem>>, %arg6: memref<3x1x128xf32, #tpu.memory_space<vmem>>, %arg7: memref<128x128xf32, #tpu.memory_space<vmem>>, %arg8: memref<1x128xf32, #tpu.memory_space<vmem>>, %arg9: memref<64x128xf32, #tpu.memory_space<vmem>>, %arg10: memref<64x128xf32, #tpu.memory_space<vmem>>) attributes {dimension_semantics = [], scalar_prefetch = 0 : i64, scratch_operands = 1 : i64, tpu.core_type = #tpu.core_type<tc>} {
    %c0 = arith.constant 0 : index
    %c0_0 = arith.constant 0 : index
    %0 = vector.load %arg0[%c0, %c0_0] : memref<64x8xf32, #tpu.memory_space<vmem>>, vector<64x8xf32>
    %c0_1 = arith.constant 0 : index
    %c0_2 = arith.constant 0 : index
    %1 = vector.load %arg2[%c0_1, %c0_2] : memref<8x128xf32, #tpu.memory_space<vmem>>, vector<8x128xf32>
    %cst = arith.constant dense<0.000000e+00> : vector<64x128xf32>
    %2 = tpu.matmul %0, %1, %cst {dimension_numbers = #tpu.dot_dimension_numbers<[1], [0], [0], [1], [0, 0, 1, 1], [], []>} : vector<64x8xf32>, vector<8x128xf32>, vector<64x128xf32> -> vector<64x128xf32>
    %c0_3 = arith.constant 0 : index
    %c0_4 = arith.constant 0 : index
    %3 = vector.load %arg3[%c0_3, %c0_4] : memref<1x128xf32, #tpu.memory_space<vmem>>, vector<1x128xf32>
    %4 = vector.broadcast %3 : vector<1x128xf32> to vector<64x128xf32>
    %5 = arith.addf %2, %4 : vector<64x128xf32>
    %cst_5 = arith.constant 0.000000e+00 : f32
    %6 = vector.broadcast %cst_5 : f32 to vector<64x128xf32>
    %7 = arith.maximumf %5, %6 : vector<64x128xf32>
    %c0_6 = arith.constant 0 : index
    %c0_7 = arith.constant 0 : index
    %8 = vector.load %arg10[%c0_6, %c0_7] : memref<64x128xf32, #tpu.memory_space<vmem>>, vector<64x128xf32>
    tpu.vector_store %arg10[%c0_6, %c0_7], %7 {strides = array<i32>} : memref<64x128xf32, #tpu.memory_space<vmem>>, vector<64x128xf32>,
    %c0_8 = arith.constant 0 : index
    %c0_9 = arith.constant 0 : index
    %9 = vector.load %arg1[%c0_8, %c0_9] : memref<64x64xbf16, #tpu.memory_space<vmem>>, vector<64x64xbf16>
    %c0_10 = arith.constant 0 : index
    %c0_11 = arith.constant 0 : index
    %10 = vector.load %arg10[%c0_10, %c0_11] : memref<64x128xf32, #tpu.memory_space<vmem>>, vector<64x128xf32>
    %11 = arith.truncf %10 : vector<64x128xf32> to vector<64x128xbf16>
    %cst_12 = arith.constant dense<0.000000e+00> : vector<64x128xf32>
    %12 = tpu.matmul %9, %11, %cst_12 {dimension_numbers = #tpu.dot_dimension_numbers<[1], [0], [0], [1], [0, 0, 1, 1], [], []>} : vector<64x64xbf16>, vector<64x128xbf16>, vector<64x128xf32> -> vector<64x128xf32>
    %c0_13 = arith.constant 0 : index
    %c0_14 = arith.constant 0 : index
    %c0_15 = arith.constant 0 : index
    %13 = vector.load %arg4[%c0_13, %c0_14, %c0_15] : memref<3x128x128xf32, #tpu.memory_space<vmem>>, vector<1x128x128xf32>
    %14 = vector.shape_cast %13 : vector<1x128x128xf32> to vector<128x128xf32>
    %cst_16 = arith.constant dense<0.000000e+00> : vector<64x128xf32>
    %15 = tpu.matmul %12, %14, %cst_16 {dimension_numbers = #tpu.dot_dimension_numbers<[1], [0], [0], [1], [0, 0, 1, 1], [], []>} : vector<64x128xf32>, vector<128x128xf32>, vector<64x128xf32> -> vector<64x128xf32>
    %c0_17 = arith.constant 0 : index
    %c0_18 = arith.constant 0 : index
    %c0_19 = arith.constant 0 : index
    %16 = vector.load %arg5[%c0_17, %c0_18, %c0_19] : memref<3x128x128xf32, #tpu.memory_space<vmem>>, vector<1x128x128xf32>
    %17 = vector.shape_cast %16 : vector<1x128x128xf32> to vector<128x128xf32>
    %cst_20 = arith.constant dense<0.000000e+00> : vector<64x128xf32>
    %18 = tpu.matmul %10, %17, %cst_20 {dimension_numbers = #tpu.dot_dimension_numbers<[1], [0], [0], [1], [0, 0, 1, 1], [], []>} : vector<64x128xf32>, vector<128x128xf32>, vector<64x128xf32> -> vector<64x128xf32>
    %19 = arith.addf %15, %18 : vector<64x128xf32>
    %c0_21 = arith.constant 0 : index
    %c0_22 = arith.constant 0 : index
    %c0_23 = arith.constant 0 : index
    %20 = vector.load %arg6[%c0_21, %c0_22, %c0_23] : memref<3x1x128xf32, #tpu.memory_space<vmem>>, vector<1x1x128xf32>
    %21 = vector.shape_cast %20 : vector<1x1x128xf32> to vector<1x128xf32>
    %22 = vector.broadcast %21 : vector<1x128xf32> to vector<64x128xf32>
    %23 = arith.addf %19, %22 : vector<64x128xf32>
    %cst_24 = arith.constant 0.000000e+00 : f32
    %24 = vector.broadcast %cst_24 : f32 to vector<64x128xf32>
    %25 = arith.maximumf %23, %24 : vector<64x128xf32>
    %c0_25 = arith.constant 0 : index
    %c0_26 = arith.constant 0 : index
    %26 = vector.load %arg10[%c0_25, %c0_26] : memref<64x128xf32, #tpu.memory_space<vmem>>, vector<64x128xf32>
    tpu.vector_store %arg10[%c0_25, %c0_26], %25 {strides = array<i32>} : memref<64x128xf32, #tpu.memory_space<vmem>>, vector<64x128xf32>,
    %c0_27 = arith.constant 0 : index
    %c0_28 = arith.constant 0 : index
    %27 = vector.load %arg10[%c0_27, %c0_28] : memref<64x128xf32, #tpu.memory_space<vmem>>, vector<64x128xf32>
    %28 = arith.truncf %27 : vector<64x128xf32> to vector<64x128xbf16>
    %cst_29 = arith.constant dense<0.000000e+00> : vector<64x128xf32>
    %29 = tpu.matmul %9, %28, %cst_29 {dimension_numbers = #tpu.dot_dimension_numbers<[1], [0], [0], [1], [0, 0, 1, 1], [], []>} : vector<64x64xbf16>, vector<64x128xbf16>, vector<64x128xf32> -> vector<64x128xf32>
    %c1 = arith.constant 1 : index
    %c0_30 = arith.constant 0 : index
    %c0_31 = arith.constant 0 : index
    %30 = vector.load %arg4[%c1, %c0_30, %c0_31] : memref<3x128x128xf32, #tpu.memory_space<vmem>>, vector<1x128x128xf32>
    %31 = vector.shape_cast %30 : vector<1x128x128xf32> to vector<128x128xf32>
    %cst_32 = arith.constant dense<0.000000e+00> : vector<64x128xf32>
    %32 = tpu.matmul %29, %31, %cst_32 {dimension_numbers = #tpu.dot_dimension_numbers<[1], [0], [0], [1], [0, 0, 1, 1], [], []>} : vector<64x128xf32>, vector<128x128xf32>, vector<64x128xf32> -> vector<64x128xf32>
    %c1_33 = arith.constant 1 : index
    %c0_34 = arith.constant 0 : index
    %c0_35 = arith.constant 0 : index
    %33 = vector.load %arg5[%c1_33, %c0_34, %c0_35] : memref<3x128x128xf32, #tpu.memory_space<vmem>>, vector<1x128x128xf32>
    %34 = vector.shape_cast %33 : vector<1x128x128xf32> to vector<128x128xf32>
    %cst_36 = arith.constant dense<0.000000e+00> : vector<64x128xf32>
    %35 = tpu.matmul %27, %34, %cst_36 {dimension_numbers = #tpu.dot_dimension_numbers<[1], [0], [0], [1], [0, 0, 1, 1], [], []>} : vector<64x128xf32>, vector<128x128xf32>, vector<64x128xf32> -> vector<64x128xf32>
    %36 = arith.addf %32, %35 : vector<64x128xf32>
    %c1_37 = arith.constant 1 : index
    %c0_38 = arith.constant 0 : index
    %c0_39 = arith.constant 0 : index
    %37 = vector.load %arg6[%c1_37, %c0_38, %c0_39] : memref<3x1x128xf32, #tpu.memory_space<vmem>>, vector<1x1x128xf32>
    %38 = vector.shape_cast %37 : vector<1x1x128xf32> to vector<1x128xf32>
    %39 = vector.broadcast %38 : vector<1x128xf32> to vector<64x128xf32>
    %40 = arith.addf %36, %39 : vector<64x128xf32>
    %cst_40 = arith.constant 0.000000e+00 : f32
    %41 = vector.broadcast %cst_40 : f32 to vector<64x128xf32>
    %42 = arith.maximumf %40, %41 : vector<64x128xf32>
    %c0_41 = arith.constant 0 : index
    %c0_42 = arith.constant 0 : index
    %43 = vector.load %arg10[%c0_41, %c0_42] : memref<64x128xf32, #tpu.memory_space<vmem>>, vector<64x128xf32>
    tpu.vector_store %arg10[%c0_41, %c0_42], %42 {strides = array<i32>} : memref<64x128xf32, #tpu.memory_space<vmem>>, vector<64x128xf32>,
    %c0_43 = arith.constant 0 : index
    %c0_44 = arith.constant 0 : index
    %44 = vector.load %arg10[%c0_43, %c0_44] : memref<64x128xf32, #tpu.memory_space<vmem>>, vector<64x128xf32>
    %45 = arith.truncf %44 : vector<64x128xf32> to vector<64x128xbf16>
    %cst_45 = arith.constant dense<0.000000e+00> : vector<64x128xf32>
    %46 = tpu.matmul %9, %45, %cst_45 {dimension_numbers = #tpu.dot_dimension_numbers<[1], [0], [0], [1], [0, 0, 1, 1], [], []>} : vector<64x64xbf16>, vector<64x128xbf16>, vector<64x128xf32> -> vector<64x128xf32>
    %c2 = arith.constant 2 : index
    %c0_46 = arith.constant 0 : index
    %c0_47 = arith.constant 0 : index
    %47 = vector.load %arg4[%c2, %c0_46, %c0_47] : memref<3x128x128xf32, #tpu.memory_space<vmem>>, vector<1x128x128xf32>
    %48 = vector.shape_cast %47 : vector<1x128x128xf32> to vector<128x128xf32>
    %cst_48 = arith.constant dense<0.000000e+00> : vector<64x128xf32>
    %49 = tpu.matmul %46, %48, %cst_48 {dimension_numbers = #tpu.dot_dimension_numbers<[1], [0], [0], [1], [0, 0, 1, 1], [], []>} : vector<64x128xf32>, vector<128x128xf32>, vector<64x128xf32> -> vector<64x128xf32>
    %c2_49 = arith.constant 2 : index
    %c0_50 = arith.constant 0 : index
    %c0_51 = arith.constant 0 : index
    %50 = vector.load %arg5[%c2_49, %c0_50, %c0_51] : memref<3x128x128xf32, #tpu.memory_space<vmem>>, vector<1x128x128xf32>
    %51 = vector.shape_cast %50 : vector<1x128x128xf32> to vector<128x128xf32>
    %cst_52 = arith.constant dense<0.000000e+00> : vector<64x128xf32>
    %52 = tpu.matmul %44, %51, %cst_52 {dimension_numbers = #tpu.dot_dimension_numbers<[1], [0], [0], [1], [0, 0, 1, 1], [], []>} : vector<64x128xf32>, vector<128x128xf32>, vector<64x128xf32> -> vector<64x128xf32>
    %53 = arith.addf %49, %52 : vector<64x128xf32>
    %c2_53 = arith.constant 2 : index
    %c0_54 = arith.constant 0 : index
    %c0_55 = arith.constant 0 : index
    %54 = vector.load %arg6[%c2_53, %c0_54, %c0_55] : memref<3x1x128xf32, #tpu.memory_space<vmem>>, vector<1x1x128xf32>
    %55 = vector.shape_cast %54 : vector<1x1x128xf32> to vector<1x128xf32>
    %56 = vector.broadcast %55 : vector<1x128xf32> to vector<64x128xf32>
    %57 = arith.addf %53, %56 : vector<64x128xf32>
    %cst_56 = arith.constant 0.000000e+00 : f32
    %58 = vector.broadcast %cst_56 : f32 to vector<64x128xf32>
    %59 = arith.maximumf %57, %58 : vector<64x128xf32>
    %c0_57 = arith.constant 0 : index
    %c0_58 = arith.constant 0 : index
    %60 = vector.load %arg10[%c0_57, %c0_58] : memref<64x128xf32, #tpu.memory_space<vmem>>, vector<64x128xf32>
    tpu.vector_store %arg10[%c0_57, %c0_58], %59 {strides = array<i32>} : memref<64x128xf32, #tpu.memory_space<vmem>>, vector<64x128xf32>,
    %c0_59 = arith.constant 0 : index
    %c0_60 = arith.constant 0 : index
    %61 = vector.load %arg10[%c0_59, %c0_60] : memref<64x128xf32, #tpu.memory_space<vmem>>, vector<64x128xf32>
    %c0_61 = arith.constant 0 : index
    %c0_62 = arith.constant 0 : index
    %62 = vector.load %arg7[%c0_61, %c0_62] : memref<128x128xf32, #tpu.memory_space<vmem>>, vector<128x128xf32>
    %cst_63 = arith.constant dense<0.000000e+00> : vector<64x128xf32>
    %63 = tpu.matmul %61, %62, %cst_63 {dimension_numbers = #tpu.dot_dimension_numbers<[1], [0], [0], [1], [0, 0, 1, 1], [], []>} : vector<64x128xf32>, vector<128x128xf32>, vector<64x128xf32> -> vector<64x128xf32>
    %c0_64 = arith.constant 0 : index
    %c0_65 = arith.constant 0 : index
    %64 = vector.load %arg8[%c0_64, %c0_65] : memref<1x128xf32, #tpu.memory_space<vmem>>, vector<1x128xf32>
    %65 = vector.broadcast %64 : vector<1x128xf32> to vector<64x128xf32>
    %66 = arith.addf %63, %65 : vector<64x128xf32>
    %c0_66 = arith.constant 0 : index
    %c0_67 = arith.constant 0 : index
    %67 = vector.load %arg9[%c0_66, %c0_67] : memref<64x128xf32, #tpu.memory_space<vmem>>, vector<64x128xf32>
    tpu.vector_store %arg9[%c0_66, %c0_67], %66 {strides = array<i32>} : memref<64x128xf32, #tpu.memory_space<vmem>>, vector<64x128xf32>,
    return
  }
}

</mosaic_0001>

<llo_original>
// kernel: tpu_custom_call.1
$region0: #{tpu_custom_call.1}
  #allocation0 [shape = 'u32[]', space=smem, size = 0x4, offset = 0x4, fixed_abs, tag = 'smem constant byte address 0x4 - core index']
  #allocation1 [shape = 'u32[72,128]{1,0:T(1,128)}', space=vmem, size = 0x9000, scoped, tag = 'internal scratch']
  #allocation2 [shape = 'f32[64,128]{1,0:T(8,128)}', space=vmem, size = 0x8000, scoped, tag = 'scratch operand']
  %s0 = inlined_call_operand.vmem [shape: f32[64,8], index: 0, kind: input, shape index: {}]
  %s1 = inlined_call_operand.vmem [shape: bf16[64,64], index: 1, kind: input, shape index: {}]
  %s2 = inlined_call_operand.vmem [shape: f32[8,128], index: 2, kind: input, shape index: {}]
  %s3 = inlined_call_operand.vmem [shape: f32[1,128], index: 3, kind: input, shape index: {}]
  %s4 = inlined_call_operand.hbm [shape: f32[3,128,128], index: 4, kind: input, shape index: {}]
  %s5 = inlined_call_operand.hbm [shape: f32[3,128,128], index: 5, kind: input, shape index: {}]
  %s6 = inlined_call_operand.vmem [shape: f32[3,1,128], index: 6, kind: input, shape index: {}]
  %s7 = inlined_call_operand.hbm [shape: f32[128,128], index: 7, kind: input, shape index: {}]
  %s8 = inlined_call_operand.vmem [shape: f32[1,128], index: 8, kind: input, shape index: {}]
  %s9 = inlined_call_operand.hbm [shape: f32[64,128], index: 9, kind: output, shape index: {}]
  %s10 = sld [smem:[#allocation0]]
  $region58: #{tpu_custom_call.1} parent=0
    _
  %s12 = ssub.s32 1, %s10
  %s13 = scalar_select 0, %s12, %s10
  $region1: #{tpu_custom_call.1} parent=0
    #allocation3 [shape = 'u8[196608]{0}', space=vmem, size = 0x30000, scoped, tag = 'input window, operand 4, single buffered']
    #allocation4 [shape = 's32[1]{0}', space=sflag, size = 0x4, scoped, tag = 'scoped memory for tpu_custom_call.1']
    #allocation5 [shape = 's32[1]{0}', space=sflag, size = 0x4, scoped, tag = 'scoped memory for tpu_custom_call.1']
    #allocation6 [shape = 'u8[196608]{0}', space=vmem, size = 0x30000, scoped, tag = 'input window, operand 5, single buffered']
    #allocation7 [shape = 's32[1]{0}', space=sflag, size = 0x4, scoped, tag = 'scoped memory for tpu_custom_call.1']
    #allocation8 [shape = 'u8[65536]{0}', space=vmem, size = 0x10000, scoped, tag = 'input window, operand 7, single buffered']
    #allocation9 [shape = 'u8[32768]{0}', space=vmem, size = 0x8000, scoped, tag = 'output window, operand 0, single buffered']
    %14 = vsyncpa [#allocation4], 0
    %15 = vsyncpa [#allocation7], 0
    %16 = vsyncpa [#allocation5], 0
    // Predicated region
    $region2: #{tpu_custom_call.1} parent=1 // pred_check
      _
    $region3: #{tpu_custom_call.1} parent=1 // pred_check_branch
      %18 = sbr.rel (0) target = $region5
    $region4: #{tpu_custom_call.1} parent=1 // pred_region
      _
    $region5: #{tpu_custom_call.1} parent=1 // pred_fallthru
      _
    // Predicated region
    $region6: #{tpu_custom_call.1} parent=1 // pred_check
      _
    $region7: #{tpu_custom_call.1} parent=1 // pred_check_branch
      %20 = sbr.rel (0) target = $region9
    $region8: #{tpu_custom_call.1} parent=1 // pred_region
      _
    $region9: #{tpu_custom_call.1} parent=1 // pred_fallthru
      _
    // Predicated region
    $region10: #{tpu_custom_call.1} parent=1 // pred_check
      _
    $region11: #{tpu_custom_call.1} parent=1 // pred_check_branch
      %22 = sbr.rel (0) target = $region13
    $region12: #{tpu_custom_call.1} parent=1 // pred_region
      _
    $region13: #{tpu_custom_call.1} parent=1 // pred_fallthru
      _
    // Predicated region
    $region14: #{tpu_custom_call.1} parent=1 // pred_check
      _
    $region15: #{tpu_custom_call.1} parent=1 // pred_check_branch
      %24 = sbr.rel (0) target = $region17
    $region16: #{tpu_custom_call.1} parent=1 // pred_region
      _
    $region17: #{tpu_custom_call.1} parent=1 // pred_fallthru
      _
    // Predicated region
    $region18: #{tpu_custom_call.1} parent=1 // pred_check
      _
    $region19: #{tpu_custom_call.1} parent=1 // pred_check_branch
      %26 = sbr.rel (0) target = $region21
    $region20: #{tpu_custom_call.1} parent=1 // pred_region
      %28 = vsyncadd [#allocation4], 0
      %s29 = sshll.u32 %s4, 4
      %s30 = int_to_ptr.hbm [resolvable:$true] %s29
      %s31 = sshll.u32 [#allocation3], 4
      %s32 = int_to_ptr.vmem [resolvable:$true] %s31
      %37 = dma.hbm_to_vmem [thread:$0]  %s30, 6144, %s32, [#allocation4], 128, 128, 8
    $region21: #{tpu_custom_call.1} parent=1 // pred_fallthru
      _
    // Predicated region
    $region22: #{tpu_custom_call.1} parent=1 // pred_check
      _
    $region23: #{tpu_custom_call.1} parent=1 // pred_check_branch
      %39 = sbr.rel (0) target = $region25
    $region24: #{tpu_custom_call.1} parent=1 // pred_region
      %41 = vsyncadd [#allocation7], 0
      %s42 = sshll.u32 %s5, 4
      %s43 = int_to_ptr.hbm [resolvable:$true] %s42
      %s44 = sshll.u32 [#allocation6], 4
      %s45 = int_to_ptr.vmem [resolvable:$true] %s44
      %50 = dma.hbm_to_vmem [thread:$0]  %s43, 6144, %s45, [#allocation7], 128, 128, 8
    $region25: #{tpu_custom_call.1} parent=1 // pred_fallthru
      _
    // Predicated region
    $region26: #{tpu_custom_call.1} parent=1 // pred_check
      _
    $region27: #{tpu_custom_call.1} parent=1 // pred_check_branch
      %52 = sbr.rel (0) target = $region29
    $region28: #{tpu_custom_call.1} parent=1 // pred_region
      _
    $region29: #{tpu_custom_call.1} parent=1 // pred_fallthru
      _
    // Predicated region
    $region30: #{tpu_custom_call.1} parent=1 // pred_check
      _
    $region31: #{tpu_custom_call.1} parent=1 // pred_check_branch
      %54 = sbr.rel (0) target = $region33
    $region32: #{tpu_custom_call.1} parent=1 // pred_region
      %56 = vsyncadd [#allocation7], 0
      %s57 = sshll.u32 %s7, 4
      %s58 = int_to_ptr.hbm [resolvable:$true] %s57
      %s59 = sshll.u32 [#allocation8], 4
      %s60 = int_to_ptr.vmem [resolvable:$true] %s59
      %65 = dma.hbm_to_vmem [thread:$0]  %s58, 2048, %s60, [#allocation7], 128, 128, 8
    $region33: #{tpu_custom_call.1} parent=1 // pred_fallthru
      _
    // Predicated region
    $region34: #{tpu_custom_call.1} parent=1 // pred_check
      _
    $region35: #{tpu_custom_call.1} parent=1 // pred_check_branch
      %67 = sbr.rel (0) target = $region37
    $region36: #{tpu_custom_call.1} parent=1 // pred_region
      _
    $region37: #{tpu_custom_call.1} parent=1 // pred_fallthru
      _
    // Predicated region
    $region38: #{tpu_custom_call.1} parent=1 // pred_check
      _
    $region39: #{tpu_custom_call.1} parent=1 // pred_check_branch
      %69 = sbr.rel (0) target = $region41
    $region40: #{tpu_custom_call.1} parent=1 // pred_region
      %71 = dma.done [#allocation4], 6144
    $region41: #{tpu_custom_call.1} parent=1 // pred_fallthru
      _
    // Predicated region
    $region42: #{tpu_custom_call.1} parent=1 // pred_check
      _
    $region43: #{tpu_custom_call.1} parent=1 // pred_check_branch
      %73 = sbr.rel (0) target = $region45
    $region44: #{tpu_custom_call.1} parent=1 // pred_region
      %75 = dma.done [#allocation7], 6144
    $region45: #{tpu_custom_call.1} parent=1 // pred_fallthru
      _
    // Predicated region
    $region46: #{tpu_custom_call.1} parent=1 // pred_check
      _
    $region47: #{tpu_custom_call.1} parent=1 // pred_check_branch
      %77 = sbr.rel (0) target = $region49
    $region48: #{tpu_custom_call.1} parent=1 // pred_region
      %79 = dma.done [#allocation7], 2048
    $region49: #{tpu_custom_call.1} parent=1 // pred_fallthru
      _
    %v81 = vld [vmem:[%s0] sm:$0xff]
    %v82 = vld [vmem:[%s0 + $0x8] sm:$0xff]
    %v83 = vld [vmem:[%s0 + $0x10] sm:$0xff]
    %v84 = vld [vmem:[%s0 + $0x18] sm:$0xff]
    %v85 = vld [vmem:[%s0 + $0x20] sm:$0xff]
    %v86 = vld [vmem:[%s0 + $0x28] sm:$0xff]
    %v87 = vld [vmem:[%s0 + $0x30] sm:$0xff]
    %v88 = vld [vmem:[%s0 + $0x38] sm:$0xff]
    %v89 = vld [vmem:[%s2] sm:$0xff]
    %v90 = vld [vmem:[%s3] sm:$0x1]
    %v92 = vperm.slane %v90, 0
    %vm94 = vcmask 64512
    %v96 = vsel %vm94, %v81, 0
    %v99 = vsel %vm94, %v82, 0
    %v102 = vsel %vm94, %v83, 0
    %v105 = vsel %vm94, %v84, 0
    %v108 = vsel %vm94, %v85, 0
    %v111 = vsel %vm94, %v86, 0
    %v114 = vsel %vm94, %v87, 0
    %v117 = vsel %vm94, %v88, 0
    %119 = vmatpush.msra.mxu0 0.0
    %120 = vmatpush.msra.mxu0 0.0
    %121 = vmatpush.msra.mxu0 0.0
    %122 = vmatpush.msra.mxu0 0.0
    %123 = vmatpush.msra.mxu0 0.0
    %124 = vmatpush.msra.mxu0 0.0
    %125 = vmatpush.msra.mxu0 0.0
    %126 = vmatpush.msra.mxu0 0.0
    %127 = vmatpush.msra.mxu0 0.0
    %128 = vmatpush.msra.mxu0 0.0
    %129 = vmatpush.msra.mxu0 0.0
    %130 = vmatpush.msra.mxu0 0.0
    %131 = vmatpush.msra.mxu0 0.0
    %132 = vmatpush.msra.mxu0 0.0
    %133 = vmatpush.msra.mxu0 0.0
    %134 = vmatpush.msra.mxu0 %v89
    %135 = vmatmul.f32.gmra.mxu0 %v96
    %v136 = vpop.f32.mrf.mxu0
    %v137 = vadd.f32 %v92, %v136
    %138 = vmatmul.f32.gmra.mxu0 %v99
    %v139 = vpop.f32.mrf.mxu0
    %v140 = vadd.f32 %v92, %v139
    %141 = vmatmul.f32.gmra.mxu0 %v102
    %v142 = vpop.f32.mrf.mxu0
    %v143 = vadd.f32 %v92, %v142
    %144 = vmatmul.f32.gmra.mxu0 %v105
    %v145 = vpop.f32.mrf.mxu0
    %v146 = vadd.f32 %v92, %v145
    %147 = vmatmul.f32.gmra.mxu0 %v108
    %v148 = vpop.f32.mrf.mxu0
    %v149 = vadd.f32 %v92, %v148
    %150 = vmatmul.f32.gmra.mxu0 %v111
    %v151 = vpop.f32.mrf.mxu0
    %v152 = vadd.f32 %v92, %v151
    %153 = vmatmul.f32.gmra.mxu0 %v114
    %v154 = vpop.f32.mrf.mxu0
    %v155 = vadd.f32 %v92, %v154
    %156 = vmatmul.f32.gmra.mxu0 %v117
    %v157 = vpop.f32.mrf.mxu0
    %v158 = vadd.f32 %v92, %v157
    %159 = vdwg.mxu0
    %v160 = vmax.f32 %v137, 0.0
    %v161 = vmax.f32 %v140, 0.0
    %v162 = vmax.f32 %v143, 0.0
    %v163 = vmax.f32 %v146, 0.0
    %v164 = vmax.f32 %v149, 0.0
    %v165 = vmax.f32 %v152, 0.0
    %v166 = vmax.f32 %v155, 0.0
    %v167 = vmax.f32 %v158, 0.0
    %168 = vst [vmem:[#allocation2] sm:$0xff] %v160
    %169 = vst [vmem:[#allocation2 + $0x8] sm:$0xff] %v161
    %170 = vst [vmem:[#allocation2 + $0x10] sm:$0xff] %v162
    %171 = vst [vmem:[#allocation2 + $0x18] sm:$0xff] %v163
    %172 = vst [vmem:[#allocation2 + $0x20] sm:$0xff] %v164
    %173 = vst [vmem:[#allocation2 + $0x28] sm:$0xff] %v165
    %174 = vst [vmem:[#allocation2 + $0x30] sm:$0xff] %v166
    %175 = vst [vmem:[#allocation2 + $0x38] sm:$0xff] %v167
    %v176 = vld [vmem:[%s1] sm:$0xf]
    %v177 = vld [vmem:[%s1 + $0x4] sm:$0xf]
    %v178 = vld [vmem:[%s1 + $0x8] sm:$0xf]
    %v179 = vld [vmem:[%s1 + $0xc] sm:$0xf]
    %v180 = vld [vmem:[%s1 + $0x10] sm:$0xf]
    %v181 = vld [vmem:[%s1 + $0x14] sm:$0xf]
    %v182 = vld [vmem:[%s1 + $0x18] sm:$0xf]
    %v183 = vld [vmem:[%s1 + $0x1c] sm:$0xf]
    %v184 = vld [vmem:[#allocation2] sm:$0xff]
    %v185 = vld [vmem:[#allocation2 + $0x8] sm:$0xff]
    %v186 = vld [vmem:[#allocation2 + $0x10] sm:$0xff]
    %v187 = vld [vmem:[#allocation2 + $0x18] sm:$0xff]
    %v188 = vld [vmem:[#allocation2 + $0x20] sm:$0xff]
    %v189 = vld [vmem:[#allocation2 + $0x28] sm:$0xff]
    %v190 = vld [vmem:[#allocation2 + $0x30] sm:$0xff]
    %v191 = vld [vmem:[#allocation2 + $0x38] sm:$0xff]
    %v192 = vpack.c.bf16 %v185, %v184
    %v193 = vpack.c.bf16 %v187, %v186
    %v194 = vpack.c.bf16 %v189, %v188
    %v195 = vpack.c.bf16 %v191, %v190
    %v204 = vunpack.c.l.b16 %v176
    %v205 = vunpack.c.l.b16 %v177
    %v206 = vunpack.c.l.b16 %v178
    %v207 = vunpack.c.l.b16 %v179
    %v208 = vunpack.c.l.b16 %v180
    %v209 = vunpack.c.l.b16 %v181
    %v210 = vunpack.c.l.b16 %v182
    %v211 = vunpack.c.l.b16 %v183
    %v212 = vpack.c.b16 %v205, %v204
    %v213 = vpack.c.b16 %v207, %v206
    %v214 = vpack.c.b16 %v209, %v208
    %v215 = vpack.c.b16 %v211, %v210
    %vm216 = vcmask 523264
    %v218 = vsel %vm216, %v212, 0
    %v221 = vsel %vm216, %v213, 0
    %v224 = vsel %vm216, %v214, 0
    %v227 = vsel %vm216, %v215, 0
    %229 = vmatpush.bf16.msra.mxu0 0
    %230 = vmatpush.bf16.msra.mxu0 0
    %231 = vmatpush.bf16.msra.mxu0 0
    %232 = vmatpush.bf16.msra.mxu0 0
    %233 = vmatpush.bf16.msra.mxu0 %v195
    %234 = vmatpush.bf16.msra.mxu0 %v194
    %235 = vmatpush.bf16.msra.mxu0 %v193
    %236 = vmatpush.bf16.msra.mxu0 %v192
    %237 = vmatmul.bf16.gmra.mxu0 %v218
    %v238 = vpop.f32.mrf.mxu0
    %v239 = vadd.f32 0.0, %v238
    %v240 = vpop.f32.mrf.mxu0
    %v241 = vadd.f32 0.0, %v240
    %242 = vmatmul.bf16.gmra.mxu0 %v221
    %v243 = vpop.f32.mrf.mxu0
    %v244 = vadd.f32 0.0, %v243
    %v245 = vpop.f32.mrf.mxu0
    %v246 = vadd.f32 0.0, %v245
    %247 = vmatmul.bf16.gmra.mxu0 %v224
    %v248 = vpop.f32.mrf.mxu0
    %v249 = vadd.f32 0.0, %v248
    %v250 = vpop.f32.mrf.mxu0
    %v251 = vadd.f32 0.0, %v250
    %252 = vmatmul.bf16.gmra.mxu0 %v227
    %v253 = vpop.f32.mrf.mxu0
    %v254 = vadd.f32 0.0, %v253
    %v255 = vpop.f32.mrf.mxu0
    %v256 = vadd.f32 0.0, %v255
    %257 = vdwg.mxu0
    %v258 = vld [vmem:[#allocation3] sm:$0xff]
    %v259 = vld [vmem:[#allocation3 + $0x8] sm:$0xff]
    %v260 = vld [vmem:[#allocation3 + $0x10] sm:$0xff]
    %v261 = vld [vmem:[#allocation3 + $0x18] sm:$0xff]
    %v262 = vld [vmem:[#allocation3 + $0x20] sm:$0xff]
    %v263 = vld [vmem:[#allocation3 + $0x28] sm:$0xff]
    %v264 = vld [vmem:[#allocation3 + $0x30] sm:$0xff]
    %v265 = vld [vmem:[#allocation3 + $0x38] sm:$0xff]
    %v266 = vld [vmem:[#allocation3 + $0x40] sm:$0xff]
    %v267 = vld [vmem:[#allocation3 + $0x48] sm:$0xff]
    %v268 = vld [vmem:[#allocation3 + $0x50] sm:$0xff]
    %v269 = vld [vmem:[#allocation3 + $0x58] sm:$0xff]
    %v270 = vld [vmem:[#allocation3 + $0x60] sm:$0xff]
    %v271 = vld [vmem:[#allocation3 + $0x68] sm:$0xff]
    %v272 = vld [vmem:[#allocation3 + $0x70] sm:$0xff]
    %v273 = vld [vmem:[#allocation3 + $0x78] sm:$0xff]
    %v274 = vld [vmem:[#allocation6] sm:$0xff]
    %v275 = vld [vmem:[#allocation6 + $0x8] sm:$0xff]
    %v276 = vld [vmem:[#allocation6 + $0x10] sm:$0xff]
    %v277 = vld [vmem:[#allocation6 + $0x18] sm:$0xff]
    %v278 = vld [vmem:[#allocation6 + $0x20] sm:$0xff]
    %v279 = vld [vmem:[#allocation6 + $0x28] sm:$0xff]
    %v280 = vld [vmem:[#allocation6 + $0x30] sm:$0xff]
    %v281 = vld [vmem:[#allocation6 + $0x38] sm:$0xff]
    %v282 = vld [vmem:[#allocation6 + $0x40] sm:$0xff]
    %v283 = vld [vmem:[#allocation6 + $0x48] sm:$0xff]
    %v284 = vld [vmem:[#allocation6 + $0x50] sm:$0xff]
    %v285 = vld [vmem:[#allocation6 + $0x58] sm:$0xff]
    %v286 = vld [vmem:[#allocation6 + $0x60] sm:$0xff]
    %v287 = vld [vmem:[#allocation6 + $0x68] sm:$0xff]
    %v288 = vld [vmem:[#allocation6 + $0x70] sm:$0xff]
    %v289 = vld [vmem:[#allocation6 + $0x78] sm:$0xff]
    %290 = vmatpush.msra.mxu0 %v289
    %291 = vmatpush.msra.mxu0 %v288
    %292 = vmatpush.msra.mxu0 %v287
    %293 = vmatpush.msra.mxu0 %v286
    %294 = vmatpush.msra.mxu0 %v285
    %295 = vmatpush.msra.mxu0 %v284
    %296 = vmatpush.msra.mxu0 %v283
    %297 = vmatpush.msra.mxu0 %v282
    %298 = vmatpush.msra.mxu0 %v281
    %299 = vmatpush.msra.mxu0 %v280
    %300 = vmatpush.msra.mxu0 %v279
    %301 = vmatpush.msra.mxu0 %v278
    %302 = vmatpush.msra.mxu0 %v277
    %303 = vmatpush.msra.mxu0 %v276
    %304 = vmatpush.msra.mxu0 %v275
    %305 = vmatpush.msra.mxu0 %v274
    %306 = vmatmul.f32.gmra.mxu0 %v184
    %v307 = vpop.f32.mrf.mxu0
    %v308 = vadd.f32 0.0, %v307
    %309 = vmatmul.f32.gmra.mxu0 %v185
    %v310 = vpop.f32.mrf.mxu0
    %v311 = vadd.f32 0.0, %v310
    %312 = vmatmul.f32.gmra.mxu0 %v186
    %v313 = vpop.f32.mrf.mxu0
    %v314 = vadd.f32 0.0, %v313
    %315 = vmatmul.f32.gmra.mxu0 %v187
    %v316 = vpop.f32.mrf.mxu0
    %v317 = vadd.f32 0.0, %v316
    %318 = vmatmul.f32.gmra.mxu0 %v188
    %v319 = vpop.f32.mrf.mxu0
    %v320 = vadd.f32 0.0, %v319
    %321 = vmatmul.f32.gmra.mxu0 %v189
    %v322 = vpop.f32.mrf.mxu0
    %v323 = vadd.f32 0.0, %v322
    %324 = vmatmul.f32.gmra.mxu0 %v190
    %v325 = vpop.f32.mrf.mxu0
    %v326 = vadd.f32 0.0, %v325
    %327 = vmatmul.f32.gmra.mxu0 %v191
    %v328 = vpop.f32.mrf.mxu0
    %v329 = vadd.f32 0.0, %v328
    %330 = vdwg.mxu0
    %331 = vmatpush.msra.mxu0 %v273
    %332 = vmatpush.msra.mxu0 %v272
    %333 = vmatpush.msra.mxu0 %v271
    %334 = vmatpush.msra.mxu0 %v270
    %335 = vmatpush.msra.mxu0 %v269
    %336 = vmatpush.msra.mxu0 %v268
    %337 = vmatpush.msra.mxu0 %v267
    %338 = vmatpush.msra.mxu0 %v266
    %339 = vmatpush.msra.mxu0 %v265
    %340 = vmatpush.msra.mxu0 %v264
    %341 = vmatpush.msra.mxu0 %v263
    %342 = vmatpush.msra.mxu0 %v262
    %343 = vmatpush.msra.mxu0 %v261
    %344 = vmatpush.msra.mxu0 %v260
    %345 = vmatpush.msra.mxu0 %v259
    %346 = vmatpush.msra.mxu0 %v258
    %347 = vmatmul.f32.gmra.mxu0 %v239
    %v348 = vpop.f32.mrf.mxu0
    %v349 = vadd.f32 %v308, %v348
    %350 = vmatmul.f32.gmra.mxu0 %v241
    %v351 = vpop.f32.mrf.mxu0
    %v352 = vadd.f32 %v311, %v351
    %353 = vmatmul.f32.gmra.mxu0 %v244
    %v354 = vpop.f32.mrf.mxu0
    %v355 = vadd.f32 %v314, %v354
    %356 = vmatmul.f32.gmra.mxu0 %v246
    %v357 = vpop.f32.mrf.mxu0
    %v358 = vadd.f32 %v317, %v357
    %359 = vmatmul.f32.gmra.mxu0 %v249
    %v360 = vpop.f32.mrf.mxu0
    %v361 = vadd.f32 %v320, %v360
    %362 = vmatmul.f32.gmra.mxu0 %v251
    %v363 = vpop.f32.mrf.mxu0
    %v364 = vadd.f32 %v323, %v363
    %365 = vmatmul.f32.gmra.mxu0 %v254
    %v366 = vpop.f32.mrf.mxu0
    %v367 = vadd.f32 %v326, %v366
    %368 = vmatmul.f32.gmra.mxu0 %v256
    %v369 = vpop.f32.mrf.mxu0
    %v370 = vadd.f32 %v329, %v369
    %371 = vdwg.mxu0
    %v372 = vld [vmem:[%s6] sm:$0x1]
    %v374 = vperm.slane %v372, 0
    %v376 = vadd.f32 %v349, %v374
    %v377 = vadd.f32 %v352, %v374
    %v378 = vadd.f32 %v355, %v374
    %v379 = vadd.f32 %v358, %v374
    %v380 = vadd.f32 %v361, %v374
    %v381 = vadd.f32 %v364, %v374
    %v382 = vadd.f32 %v367, %v374
    %v383 = vadd.f32 %v370, %v374
    %v384 = vmax.f32 %v376, 0.0
    %v385 = vmax.f32 %v377, 0.0
    %v386 = vmax.f32 %v378, 0.0
    %v387 = vmax.f32 %v379, 0.0
    %v388 = vmax.f32 %v380, 0.0
    %v389 = vmax.f32 %v381, 0.0
    %v390 = vmax.f32 %v382, 0.0
    %v391 = vmax.f32 %v383, 0.0
    %392 = vst [vmem:[#allocation2] sm:$0xff] %v384
    %393 = vst [vmem:[#allocation2 + $0x8] sm:$0xff] %v385
    %394 = vst [vmem:[#allocation2 + $0x10] sm:$0xff] %v386
    %395 = vst [vmem:[#allocation2 + $0x18] sm:$0xff] %v387
    %396 = vst [vmem:[#allocation2 + $0x20] sm:$0xff] %v388
    %397 = vst [vmem:[#allocation2 + $0x28] sm:$0xff] %v389
    %398 = vst [vmem:[#allocation2 + $0x30] sm:$0xff] %v390
    %399 = vst [vmem:[#allocation2 + $0x38] sm:$0xff] %v391
    %v400 = vld [vmem:[#allocation2] sm:$0xff]
    %v401 = vld [vmem:[#allocation2 + $0x8] sm:$0xff]
    %v402 = vld [vmem:[#allocation2 + $0x10] sm:$0xff]
    %v403 = vld [vmem:[#allocation2 + $0x18] sm:$0xff]
    %v404 = vld [vmem:[#allocation2 + $0x20] sm:$0xff]
    %v405 = vld [vmem:[#allocation2 + $0x28] sm:$0xff]
    %v406 = vld [vmem:[#allocation2 + $0x30] sm:$0xff]
    %v407 = vld [vmem:[#allocation2 + $0x38] sm:$0xff]
    %v408 = vpack.c.bf16 %v401, %v400
    %v409 = vpack.c.bf16 %v403, %v402
    %v410 = vpack.c.bf16 %v405, %v404
    %v411 = vpack.c.bf16 %v407, %v406
    %412 = vmatpush.bf16.msra.mxu0 0
    %413 = vmatpush.bf16.msra.mxu0 0
    %414 = vmatpush.bf16.msra.mxu0 0
    %415 = vmatpush.bf16.msra.mxu0 0
    %416 = vmatpush.bf16.msra.mxu0 %v411
    %417 = vmatpush.bf16.msra.mxu0 %v410
    %418 = vmatpush.bf16.msra.mxu0 %v409
    %419 = vmatpush.bf16.msra.mxu0 %v408
    %420 = vmatmul.bf16.gmra.mxu0 %v218
    %v421 = vpop.f32.mrf.mxu0
    %v422 = vadd.f32 0.0, %v421
    %v423 = vpop.f32.mrf.mxu0
    %v424 = vadd.f32 0.0, %v423
    %425 = vmatmul.bf16.gmra.mxu0 %v221
    %v426 = vpop.f32.mrf.mxu0
    %v427 = vadd.f32 0.0, %v426
    %v428 = vpop.f32.mrf.mxu0
    %v429 = vadd.f32 0.0, %v428
    %430 = vmatmul.bf16.gmra.mxu0 %v224
    %v431 = vpop.f32.mrf.mxu0
    %v432 = vadd.f32 0.0, %v431
    %v433 = vpop.f32.mrf.mxu0
    %v434 = vadd.f32 0.0, %v433
    %435 = vmatmul.bf16.gmra.mxu0 %v227
    %v436 = vpop.f32.mrf.mxu0
    %v437 = vadd.f32 0.0, %v436
    %v438 = vpop.f32.mrf.mxu0
    %v439 = vadd.f32 0.0, %v438
    %440 = vdwg.mxu0
    %s441 = scalar_lea.vmem [#allocation3], 128
    %v442 = vld [vmem:[%s441] sm:$0xff]
    %v443 = vld [vmem:[%s441 + $0x8] sm:$0xff]
    %v444 = vld [vmem:[%s441 + $0x10] sm:$0xff]
    %v445 = vld [vmem:[%s441 + $0x18] sm:$0xff]
    %v446 = vld [vmem:[%s441 + $0x20] sm:$0xff]
    %v447 = vld [vmem:[%s441 + $0x28] sm:$0xff]
    %v448 = vld [vmem:[%s441 + $0x30] sm:$0xff]
    %v449 = vld [vmem:[%s441 + $0x38] sm:$0xff]
    %v450 = vld [vmem:[%s441 + $0x40] sm:$0xff]
    %v451 = vld [vmem:[%s441 + $0x48] sm:$0xff]
    %v452 = vld [vmem:[%s441 + $0x50] sm:$0xff]
    %v453 = vld [vmem:[%s441 + $0x58] sm:$0xff]
    %v454 = vld [vmem:[%s441 + $0x60] sm:$0xff]
    %v455 = vld [vmem:[%s441 + $0x68] sm:$0xff]
    %v456 = vld [vmem:[%s441 + $0x70] sm:$0xff]
    %v457 = vld [vmem:[%s441 + $0x78] sm:$0xff]
    %s458 = scalar_lea.vmem [#allocation6], 128
    %v459 = vld [vmem:[%s458] sm:$0xff]
    %v460 = vld [vmem:[%s458 + $0x8] sm:$0xff]
    %v461 = vld [vmem:[%s458 + $0x10] sm:$0xff]
    %v462 = vld [vmem:[%s458 + $0x18] sm:$0xff]
    %v463 = vld [vmem:[%s458 + $0x20] sm:$0xff]
    %v464 = vld [vmem:[%s458 + $0x28] sm:$0xff]
    %v465 = vld [vmem:[%s458 + $0x30] sm:$0xff]
    %v466 = vld [vmem:[%s458 + $0x38] sm:$0xff]
    %v467 = vld [vmem:[%s458 + $0x40] sm:$0xff]
    %v468 = vld [vmem:[%s458 + $0x48] sm:$0xff]
    %v469 = vld [vmem:[%s458 + $0x50] sm:$0xff]
    %v470 = vld [vmem:[%s458 + $0x58] sm:$0xff]
    %v471 = vld [vmem:[%s458 + $0x60] sm:$0xff]
    %v472 = vld [vmem:[%s458 + $0x68] sm:$0xff]
    %v473 = vld [vmem:[%s458 + $0x70] sm:$0xff]
    %v474 = vld [vmem:[%s458 + $0x78] sm:$0xff]
    %475 = vmatpush.msra.mxu0 %v474
    %476 = vmatpush.msra.mxu0 %v473
    %477 = vmatpush.msra.mxu0 %v472
    %478 = vmatpush.msra.mxu0 %v471
    %479 = vmatpush.msra.mxu0 %v470
    %480 = vmatpush.msra.mxu0 %v469
    %481 = vmatpush.msra.mxu0 %v468
    %482 = vmatpush.msra.mxu0 %v467
    %483 = vmatpush.msra.mxu0 %v466
    %484 = vmatpush.msra.mxu0 %v465
    %485 = vmatpush.msra.mxu0 %v464
    %486 = vmatpush.msra.mxu0 %v463
    %487 = vmatpush.msra.mxu0 %v462
    %488 = vmatpush.msra.mxu0 %v461
    %489 = vmatpush.msra.mxu0 %v460
    %490 = vmatpush.msra.mxu0 %v459
    %491 = vmatmul.f32.gmra.mxu0 %v400
    %v492 = vpop.f32.mrf.mxu0
    %v493 = vadd.f32 0.0, %v492
    %494 = vmatmul.f32.gmra.mxu0 %v401
    %v495 = vpop.f32.mrf.mxu0
    %v496 = vadd.f32 0.0, %v495
    %497 = vmatmul.f32.gmra.mxu0 %v402
    %v498 = vpop.f32.mrf.mxu0
    %v499 = vadd.f32 0.0, %v498
    %500 = vmatmul.f32.gmra.mxu0 %v403
    %v501 = vpop.f32.mrf.mxu0
    %v502 = vadd.f32 0.0, %v501
    %503 = vmatmul.f32.gmra.mxu0 %v404
    %v504 = vpop.f32.mrf.mxu0
    %v505 = vadd.f32 0.0, %v504
    %506 = vmatmul.f32.gmra.mxu0 %v405
    %v507 = vpop.f32.mrf.mxu0
    %v508 = vadd.f32 0.0, %v507
    %509 = vmatmul.f32.gmra.mxu0 %v406
    %v510 = vpop.f32.mrf.mxu0
    %v511 = vadd.f32 0.0, %v510
    %512 = vmatmul.f32.gmra.mxu0 %v407
    %v513 = vpop.f32.mrf.mxu0
    %v514 = vadd.f32 0.0, %v513
    %515 = vdwg.mxu0
    %516 = vmatpush.msra.mxu0 %v457
    %517 = vmatpush.msra.mxu0 %v456
    %518 = vmatpush.msra.mxu0 %v455
    %519 = vmatpush.msra.mxu0 %v454
    %520 = vmatpush.msra.mxu0 %v453
    %521 = vmatpush.msra.mxu0 %v452
    %522 = vmatpush.msra.mxu0 %v451
    %523 = vmatpush.msra.mxu0 %v450
    %524 = vmatpush.msra.mxu0 %v449
    %525 = vmatpush.msra.mxu0 %v448
    %526 = vmatpush.msra.mxu0 %v447
    %527 = vmatpush.msra.mxu0 %v446
    %528 = vmatpush.msra.mxu0 %v445
    %529 = vmatpush.msra.mxu0 %v444
    %530 = vmatpush.msra.mxu0 %v443
    %531 = vmatpush.msra.mxu0 %v442
    %532 = vmatmul.f32.gmra.mxu0 %v422
    %v533 = vpop.f32.mrf.mxu0
    %v534 = vadd.f32 %v493, %v533
    %535 = vmatmul.f32.gmra.mxu0 %v424
    %v536 = vpop.f32.mrf.mxu0
    %v537 = vadd.f32 %v496, %v536
    %538 = vmatmul.f32.gmra.mxu0 %v427
    %v539 = vpop.f32.mrf.mxu0
    %v540 = vadd.f32 %v499, %v539
    %541 = vmatmul.f32.gmra.mxu0 %v429
    %v542 = vpop.f32.mrf.mxu0
    %v543 = vadd.f32 %v502, %v542
    %544 = vmatmul.f32.gmra.mxu0 %v432
    %v545 = vpop.f32.mrf.mxu0
    %v546 = vadd.f32 %v505, %v545
    %547 = vmatmul.f32.gmra.mxu0 %v434
    %v548 = vpop.f32.mrf.mxu0
    %v549 = vadd.f32 %v508, %v548
    %550 = vmatmul.f32.gmra.mxu0 %v437
    %v551 = vpop.f32.mrf.mxu0
    %v552 = vadd.f32 %v511, %v551
    %553 = vmatmul.f32.gmra.mxu0 %v439
    %v554 = vpop.f32.mrf.mxu0
    %v555 = vadd.f32 %v514, %v554
    %556 = vdwg.mxu0
    %s557 = scalar_lea.vmem %s6, 1
    %v558 = vld [vmem:[%s557] sm:$0x1]
    %v560 = vperm.slane %v558, 0
    %v562 = vadd.f32 %v534, %v560
    %v563 = vadd.f32 %v537, %v560
    %v564 = vadd.f32 %v540, %v560
    %v565 = vadd.f32 %v543, %v560
    %v566 = vadd.f32 %v546, %v560
    %v567 = vadd.f32 %v549, %v560
    %v568 = vadd.f32 %v552, %v560
    %v569 = vadd.f32 %v555, %v560
    %v570 = vmax.f32 %v562, 0.0
    %v571 = vmax.f32 %v563, 0.0
    %v572 = vmax.f32 %v564, 0.0
    %v573 = vmax.f32 %v565, 0.0
    %v574 = vmax.f32 %v566, 0.0
    %v575 = vmax.f32 %v567, 0.0
    %v576 = vmax.f32 %v568, 0.0
    %v577 = vmax.f32 %v569, 0.0
    %578 = vst [vmem:[#allocation2] sm:$0xff] %v570
    %579 = vst [vmem:[#allocation2 + $0x8] sm:$0xff] %v571
    %580 = vst [vmem:[#allocation2 + $0x10] sm:$0xff] %v572
    %581 = vst [vmem:[#allocation2 + $0x18] sm:$0xff] %v573
    %582 = vst [vmem:[#allocation2 + $0x20] sm:$0xff] %v574
    %583 = vst [vmem:[#allocation2 + $0x28] sm:$0xff] %v575
    %584 = vst [vmem:[#allocation2 + $0x30] sm:$0xff] %v576
    %585 = vst [vmem:[#allocation2 + $0x38] sm:$0xff] %v577
    %v586 = vld [vmem:[#allocation2] sm:$0xff]
    %v587 = vld [vmem:[#allocation2 + $0x8] sm:$0xff]
    %v588 = vld [vmem:[#allocation2 + $0x10] sm:$0xff]
    %v589 = vld [vmem:[#allocation2 + $0x18] sm:$0xff]
    %v590 = vld [vmem:[#allocation2 + $0x20] sm:$0xff]
    %v591 = vld [vmem:[#allocation2 + $0x28] sm:$0xff]
    %v592 = vld [vmem:[#allocation2 + $0x30] sm:$0xff]
    %v593 = vld [vmem:[#allocation2 + $0x38] sm:$0xff]
    %v594 = vpack.c.bf16 %v587, %v586
    %v595 = vpack.c.bf16 %v589, %v588
    %v596 = vpack.c.bf16 %v591, %v590
    %v597 = vpack.c.bf16 %v593, %v592
    %598 = vmatpush.bf16.msra.mxu0 0
    %599 = vmatpush.bf16.msra.mxu0 0
    %600 = vmatpush.bf16.msra.mxu0 0
    %601 = vmatpush.bf16.msra.mxu0 0
    %602 = vmatpush.bf16.msra.mxu0 %v597
    %603 = vmatpush.bf16.msra.mxu0 %v596
    %604 = vmatpush.bf16.msra.mxu0 %v595
    %605 = vmatpush.bf16.msra.mxu0 %v594
    %606 = vmatmul.bf16.gmra.mxu0 %v218
    %v607 = vpop.f32.mrf.mxu0
    %v608 = vadd.f32 0.0, %v607
    %v609 = vpop.f32.mrf.mxu0
    %v610 = vadd.f32 0.0, %v609
    %611 = vmatmul.bf16.gmra.mxu0 %v221
    %v612 = vpop.f32.mrf.mxu0
    %v613 = vadd.f32 0.0, %v612
    %v614 = vpop.f32.mrf.mxu0
    %v615 = vadd.f32 0.0, %v614
    %616 = vmatmul.bf16.gmra.mxu0 %v224
    %v617 = vpop.f32.mrf.mxu0
    %v618 = vadd.f32 0.0, %v617
    %v619 = vpop.f32.mrf.mxu0
    %v620 = vadd.f32 0.0, %v619
    %621 = vmatmul.bf16.gmra.mxu0 %v227
    %v622 = vpop.f32.mrf.mxu0
    %v623 = vadd.f32 0.0, %v622
    %v624 = vpop.f32.mrf.mxu0
    %v625 = vadd.f32 0.0, %v624
    %626 = vdwg.mxu0
    %s627 = scalar_lea.vmem [#allocation3], 256
    %v628 = vld [vmem:[%s627] sm:$0xff]
    %v629 = vld [vmem:[%s627 + $0x8] sm:$0xff]
    %v630 = vld [vmem:[%s627 + $0x10] sm:$0xff]
    %v631 = vld [vmem:[%s627 + $0x18] sm:$0xff]
    %v632 = vld [vmem:[%s627 + $0x20] sm:$0xff]
    %v633 = vld [vmem:[%s627 + $0x28] sm:$0xff]
    %v634 = vld [vmem:[%s627 + $0x30] sm:$0xff]
    %v635 = vld [vmem:[%s627 + $0x38] sm:$0xff]
    %v636 = vld [vmem:[%s627 + $0x40] sm:$0xff]
    %v637 = vld [vmem:[%s627 + $0x48] sm:$0xff]
    %v638 = vld [vmem:[%s627 + $0x50] sm:$0xff]
    %v639 = vld [vmem:[%s627 + $0x58] sm:$0xff]
    %v640 = vld [vmem:[%s627 + $0x60] sm:$0xff]
    %v641 = vld [vmem:[%s627 + $0x68] sm:$0xff]
    %v642 = vld [vmem:[%s627 + $0x70] sm:$0xff]
    %v643 = vld [vmem:[%s627 + $0x78] sm:$0xff]
    %s644 = scalar_lea.vmem [#allocation6], 256
    %v645 = vld [vmem:[%s644] sm:$0xff]
    %v646 = vld [vmem:[%s644 + $0x8] sm:$0xff]
    %v647 = vld [vmem:[%s644 + $0x10] sm:$0xff]
    %v648 = vld [vmem:[%s644 + $0x18] sm:$0xff]
    %v649 = vld [vmem:[%s644 + $0x20] sm:$0xff]
    %v650 = vld [vmem:[%s644 + $0x28] sm:$0xff]
    %v651 = vld [vmem:[%s644 + $0x30] sm:$0xff]
    %v652 = vld [vmem:[%s644 + $0x38] sm:$0xff]
    %v653 = vld [vmem:[%s644 + $0x40] sm:$0xff]
    %v654 = vld [vmem:[%s644 + $0x48] sm:$0xff]
    %v655 = vld [vmem:[%s644 + $0x50] sm:$0xff]
    %v656 = vld [vmem:[%s644 + $0x58] sm:$0xff]
    %v657 = vld [vmem:[%s644 + $0x60] sm:$0xff]
    %v658 = vld [vmem:[%s644 + $0x68] sm:$0xff]
    %v659 = vld [vmem:[%s644 + $0x70] sm:$0xff]
    %v660 = vld [vmem:[%s644 + $0x78] sm:$0xff]
    %661 = vmatpush.msra.mxu0 %v660
    %662 = vmatpush.msra.mxu0 %v659
    %663 = vmatpush.msra.mxu0 %v658
    %664 = vmatpush.msra.mxu0 %v657
    %665 = vmatpush.msra.mxu0 %v656
    %666 = vmatpush.msra.mxu0 %v655
    %667 = vmatpush.msra.mxu0 %v654
    %668 = vmatpush.msra.mxu0 %v653
    %669 = vmatpush.msra.mxu0 %v652
    %670 = vmatpush.msra.mxu0 %v651
    %671 = vmatpush.msra.mxu0 %v650
    %672 = vmatpush.msra.mxu0 %v649
    %673 = vmatpush.msra.mxu0 %v648
    %674 = vmatpush.msra.mxu0 %v647
    %675 = vmatpush.msra.mxu0 %v646
    %676 = vmatpush.msra.mxu0 %v645
    %677 = vmatmul.f32.gmra.mxu0 %v586
    %v678 = vpop.f32.mrf.mxu0
    %v679 = vadd.f32 0.0, %v678
    %680 = vmatmul.f32.gmra.mxu0 %v587
    %v681 = vpop.f32.mrf.mxu0
    %v682 = vadd.f32 0.0, %v681
    %683 = vmatmul.f32.gmra.mxu0 %v588
    %v684 = vpop.f32.mrf.mxu0
    %v685 = vadd.f32 0.0, %v684
    %686 = vmatmul.f32.gmra.mxu0 %v589
    %v687 = vpop.f32.mrf.mxu0
    %v688 = vadd.f32 0.0, %v687
    %689 = vmatmul.f32.gmra.mxu0 %v590
    %v690 = vpop.f32.mrf.mxu0
    %v691 = vadd.f32 0.0, %v690
    %692 = vmatmul.f32.gmra.mxu0 %v591
    %v693 = vpop.f32.mrf.mxu0
    %v694 = vadd.f32 0.0, %v693
    %695 = vmatmul.f32.gmra.mxu0 %v592
    %v696 = vpop.f32.mrf.mxu0
    %v697 = vadd.f32 0.0, %v696
    %698 = vmatmul.f32.gmra.mxu0 %v593
    %v699 = vpop.f32.mrf.mxu0
    %v700 = vadd.f32 0.0, %v699
    %701 = vdwg.mxu0
    %702 = vmatpush.msra.mxu0 %v643
    %703 = vmatpush.msra.mxu0 %v642
    %704 = vmatpush.msra.mxu0 %v641
    %705 = vmatpush.msra.mxu0 %v640
    %706 = vmatpush.msra.mxu0 %v639
    %707 = vmatpush.msra.mxu0 %v638
    %708 = vmatpush.msra.mxu0 %v637
    %709 = vmatpush.msra.mxu0 %v636
    %710 = vmatpush.msra.mxu0 %v635
    %711 = vmatpush.msra.mxu0 %v634
    %712 = vmatpush.msra.mxu0 %v633
    %713 = vmatpush.msra.mxu0 %v632
    %714 = vmatpush.msra.mxu0 %v631
    %715 = vmatpush.msra.mxu0 %v630
    %716 = vmatpush.msra.mxu0 %v629
    %717 = vmatpush.msra.mxu0 %v628
    %718 = vmatmul.f32.gmra.mxu0 %v608
    %v719 = vpop.f32.mrf.mxu0
    %v720 = vadd.f32 %v679, %v719
    %721 = vmatmul.f32.gmra.mxu0 %v610
    %v722 = vpop.f32.mrf.mxu0
    %v723 = vadd.f32 %v682, %v722
    %724 = vmatmul.f32.gmra.mxu0 %v613
    %v725 = vpop.f32.mrf.mxu0
    %v726 = vadd.f32 %v685, %v725
    %727 = vmatmul.f32.gmra.mxu0 %v615
    %v728 = vpop.f32.mrf.mxu0
    %v729 = vadd.f32 %v688, %v728
    %730 = vmatmul.f32.gmra.mxu0 %v618
    %v731 = vpop.f32.mrf.mxu0
    %v732 = vadd.f32 %v691, %v731
    %733 = vmatmul.f32.gmra.mxu0 %v620
    %v734 = vpop.f32.mrf.mxu0
    %v735 = vadd.f32 %v694, %v734
    %736 = vmatmul.f32.gmra.mxu0 %v623
    %v737 = vpop.f32.mrf.mxu0
    %v738 = vadd.f32 %v697, %v737
    %739 = vmatmul.f32.gmra.mxu0 %v625
    %v740 = vpop.f32.mrf.mxu0
    %v741 = vadd.f32 %v700, %v740
    %742 = vdwg.mxu0
    %s743 = scalar_lea.vmem %s6, 2
    %v744 = vld [vmem:[%s743] sm:$0x1]
    %v746 = vperm.slane %v744, 0
    %v748 = vadd.f32 %v720, %v746
    %v749 = vadd.f32 %v723, %v746
    %v750 = vadd.f32 %v726, %v746
    %v751 = vadd.f32 %v729, %v746
    %v752 = vadd.f32 %v732, %v746
    %v753 = vadd.f32 %v735, %v746
    %v754 = vadd.f32 %v738, %v746
    %v755 = vadd.f32 %v741, %v746
    %v756 = vmax.f32 %v748, 0.0
    %v757 = vmax.f32 %v749, 0.0
    %v758 = vmax.f32 %v750, 0.0
    %v759 = vmax.f32 %v751, 0.0
    %v760 = vmax.f32 %v752, 0.0
    %v761 = vmax.f32 %v753, 0.0
    %v762 = vmax.f32 %v754, 0.0
    %v763 = vmax.f32 %v755, 0.0
    %764 = vst [vmem:[#allocation2] sm:$0xff] %v756
    %765 = vst [vmem:[#allocation2 + $0x8] sm:$0xff] %v757
    %766 = vst [vmem:[#allocation2 + $0x10] sm:$0xff] %v758
    %767 = vst [vmem:[#allocation2 + $0x18] sm:$0xff] %v759
    %768 = vst [vmem:[#allocation2 + $0x20] sm:$0xff] %v760
    %769 = vst [vmem:[#allocation2 + $0x28] sm:$0xff] %v761
    %770 = vst [vmem:[#allocation2 + $0x30] sm:$0xff] %v762
    %771 = vst [vmem:[#allocation2 + $0x38] sm:$0xff] %v763
    %v772 = vld [vmem:[#allocation2] sm:$0xff]
    %v773 = vld [vmem:[#allocation2 + $0x8] sm:$0xff]
    %v774 = vld [vmem:[#allocation2 + $0x10] sm:$0xff]
    %v775 = vld [vmem:[#allocation2 + $0x18] sm:$0xff]
    %v776 = vld [vmem:[#allocation2 + $0x20] sm:$0xff]
    %v777 = vld [vmem:[#allocation2 + $0x28] sm:$0xff]
    %v778 = vld [vmem:[#allocation2 + $0x30] sm:$0xff]
    %v779 = vld [vmem:[#allocation2 + $0x38] sm:$0xff]
    %v780 = vld [vmem:[#allocation8] sm:$0xff]
    %v781 = vld [vmem:[#allocation8 + $0x8] sm:$0xff]
    %v782 = vld [vmem:[#allocation8 + $0x10] sm:$0xff]
    %v783 = vld [vmem:[#allocation8 + $0x18] sm:$0xff]
    %v784 = vld [vmem:[#allocation8 + $0x20] sm:$0xff]
    %v785 = vld [vmem:[#allocation8 + $0x28] sm:$0xff]
    %v786 = vld [vmem:[#allocation8 + $0x30] sm:$0xff]
    %v787 = vld [vmem:[#allocation8 + $0x38] sm:$0xff]
    %v788 = vld [vmem:[#allocation8 + $0x40] sm:$0xff]
    %v789 = vld [vmem:[#allocation8 + $0x48] sm:$0xff]
    %v790 = vld [vmem:[#allocation8 + $0x50] sm:$0xff]
    %v791 = vld [vmem:[#allocation8 + $0x58] sm:$0xff]
    %v792 = vld [vmem:[#allocation8 + $0x60] sm:$0xff]
    %v793 = vld [vmem:[#allocation8 + $0x68] sm:$0xff]
    %v794 = vld [vmem:[#allocation8 + $0x70] sm:$0xff]
    %v795 = vld [vmem:[#allocation8 + $0x78] sm:$0xff]
    %v796 = vld [vmem:[%s8] sm:$0x1]
    %v798 = vperm.slane %v796, 0
    %800 = vmatpush.msra.mxu0 %v795
    %801 = vmatpush.msra.mxu0 %v794
    %802 = vmatpush.msra.mxu0 %v793
    %803 = vmatpush.msra.mxu0 %v792
    %804 = vmatpush.msra.mxu0 %v791
    %805 = vmatpush.msra.mxu0 %v790
    %806 = vmatpush.msra.mxu0 %v789
    %807 = vmatpush.msra.mxu0 %v788
    %808 = vmatpush.msra.mxu0 %v787
    %809 = vmatpush.msra.mxu0 %v786
    %810 = vmatpush.msra.mxu0 %v785
    %811 = vmatpush.msra.mxu0 %v784
    %812 = vmatpush.msra.mxu0 %v783
    %813 = vmatpush.msra.mxu0 %v782
    %814 = vmatpush.msra.mxu0 %v781
    %815 = vmatpush.msra.mxu0 %v780
    %816 = vmatmul.f32.gmra.mxu0 %v772
    %v817 = vpop.f32.mrf.mxu0
    %v818 = vadd.f32 %v798, %v817
    %819 = vmatmul.f32.gmra.mxu0 %v773
    %v820 = vpop.f32.mrf.mxu0
    %v821 = vadd.f32 %v798, %v820
    %822 = vmatmul.f32.gmra.mxu0 %v774
    %v823 = vpop.f32.mrf.mxu0
    %v824 = vadd.f32 %v798, %v823
    %825 = vmatmul.f32.gmra.mxu0 %v775
    %v826 = vpop.f32.mrf.mxu0
    %v827 = vadd.f32 %v798, %v826
    %828 = vmatmul.f32.gmra.mxu0 %v776
    %v829 = vpop.f32.mrf.mxu0
    %v830 = vadd.f32 %v798, %v829
    %831 = vmatmul.f32.gmra.mxu0 %v777
    %v832 = vpop.f32.mrf.mxu0
    %v833 = vadd.f32 %v798, %v832
    %834 = vmatmul.f32.gmra.mxu0 %v778
    %v835 = vpop.f32.mrf.mxu0
    %v836 = vadd.f32 %v798, %v835
    %837 = vmatmul.f32.gmra.mxu0 %v779
    %v838 = vpop.f32.mrf.mxu0
    %v839 = vadd.f32 %v798, %v838
    %840 = vdwg.mxu0
    %841 = vst [vmem:[#allocation9] sm:$0xff] %v818
    %842 = vst [vmem:[#allocation9 + $0x8] sm:$0xff] %v821
    %843 = vst [vmem:[#allocation9 + $0x10] sm:$0xff] %v824
    %844 = vst [vmem:[#allocation9 + $0x18] sm:$0xff] %v827
    %845 = vst [vmem:[#allocation9 + $0x20] sm:$0xff] %v830
    %846 = vst [vmem:[#allocation9 + $0x28] sm:$0xff] %v833
    %847 = vst [vmem:[#allocation9 + $0x30] sm:$0xff] %v836
    %848 = vst [vmem:[#allocation9 + $0x38] sm:$0xff] %v839
    // Predicated region
    $region50: #{tpu_custom_call.1} parent=1 // pred_check
      _
    $region51: #{tpu_custom_call.1} parent=1 // pred_check_branch
      %850 = sbr.rel (0) target = $region53
    $region52: #{tpu_custom_call.1} parent=1 // pred_region
      %852 = vsyncadd [#allocation5], 0
      %s853 = sshll.u32 [#allocation9], 4
      %s854 = int_to_ptr.vmem [resolvable:$true] %s853
      %s855 = sshll.u32 %s9, 4
      %s856 = int_to_ptr.hbm [resolvable:$true] %s855
      %861 = dma.vmem_to_hbm [thread:$0]  %s854, 1024, %s856, [#allocation5], 128, 128, 8
    $region53: #{tpu_custom_call.1} parent=1 // pred_fallthru
      _
    // Predicated region
    $region54: #{tpu_custom_call.1} parent=1 // pred_check
      _
    $region55: #{tpu_custom_call.1} parent=1 // pred_check_branch
      %863 = sbr.rel (0) target = $region57
    $region56: #{tpu_custom_call.1} parent=1 // pred_region
      %865 = dma.done [#allocation5], 1024
    $region57: #{tpu_custom_call.1} parent=1 // pred_fallthru
      _
    %866 = vsyncpa [#allocation4], 1
    %867 = vsyncpa [#allocation7], 1
    %868 = vsyncpa [#allocation5], 1

</llo_original>
